<compile_context>
chip_gen: v7x
topology: tpu7x:2x2x1
jax: 0.10.0
libtpu: 0.0.40
codegen_flags: <defaults>
</compile_context>

<pallas_src>
from functools import partial

import jax
import jax.numpy as jnp
from jax.experimental import pallas as pl
from jax.experimental.pallas import tpu as pltpu


def _dqnet_kernel(num_layers, n_states, *refs):
    """refs = (idx_ref, emb_ref, w0, b0, ..., w_{L-1}, b_{L-1}, o_ref)."""
    idx_ref = refs[0]        # (Bt, 1) int32 state indices
    emb_ref = refs[1]        # (nStates, E) f32 embedding table
    o_ref = refs[-1]         # (Bt, nActions) f32
    wb_refs = refs[2:-1]

    bt = idx_ref.shape[0]

    # Fused embedding gather as a one-hot matmul on the MXU:
    #   onehot[b, s] = (s == idx[b]);  h = onehot @ table  == table[idx]  (exact).
    lane_ids = jax.lax.broadcasted_iota(jnp.int32, (bt, n_states), 1)
    onehot = (lane_ids == idx_ref[...]).astype(jnp.float32)          # (Bt, nStates)
    h = jnp.dot(onehot, emb_ref[...], preferred_element_type=jnp.float32)

    # MLP chain, fully resident (activations are at most one vreg at these sizes).
    for layer in range(num_layers):
        w = wb_refs[2 * layer][...]
        b = wb_refs[2 * layer + 1][...]          # (1, out) — broadcasts over batch
        h = jnp.dot(h, w, preferred_element_type=jnp.float32) + b
        if layer < num_layers - 1:               # ReLU on all but the last layer
            h = jnp.maximum(h, 0.0)
    o_ref[...] = h.astype(o_ref.dtype)


def prepare_params(emb_table, weights, biases):
    """One-time parameter prep (casts/reshapes hoisted out of the forward)."""
    emb = emb_table.astype(jnp.float32)
    ws = tuple(w.astype(jnp.float32) for w in weights)
    bs = tuple(b.astype(jnp.float32).reshape(1, -1) for b in biases)
    return emb, ws, bs


@partial(jax.jit, static_argnames=("batch_tile",))
def dqnet_forward(x_idx, emb_table, weights, biases, *, batch_tile=None):
    """x_idx: (B,) int32 state indices. Returns (B, nActions) f32 Q-values."""
    B = x_idx.shape[0]
    n_states, n_emb = emb_table.shape
    num_layers = len(weights)
    n_actions = weights[-1].shape[1]

    x2d = x_idx.astype(jnp.int32).reshape(B, 1)

    # Small batch: single grid step (minimize fixed per-step overhead).
    # Large batch: split batch over a "parallel" grid axis (v7x: 2 TensorCores).
    if batch_tile is None or batch_tile >= B or B % batch_tile != 0:
        bt, grid, sem = B, (1,), ("arbitrary",)
    else:
        bt, grid, sem = batch_tile, (B // batch_tile,), ("parallel",)

    in_specs = [
        pl.BlockSpec((bt, 1), lambda i: (i, 0)),                # state indices
        pl.BlockSpec((n_states, n_emb), lambda i: (0, 0)),      # embedding table
    ]
    args = [x2d, emb_table]
    for w, b in zip(weights, biases):
        in_specs.append(pl.BlockSpec(w.shape, lambda i: (0, 0)))
        in_specs.append(pl.BlockSpec(b.shape, lambda i: (0, 0)))
        args.append(w)
        args.append(b)

    out_spec = pl.BlockSpec((bt, n_actions), lambda i: (i, 0))

    return pl.pallas_call(
        partial(_dqnet_kernel, num_layers, n_states),
        grid=grid,
        in_specs=in_specs,
        out_specs=out_spec,
        out_shape=jax.ShapeDtypeStruct((B, n_actions), jnp.float32),
        compiler_params=pltpu.CompilerParams(dimension_semantics=sem),
    )(*args)


def _reference_forward(x_idx, emb_table, weights, biases):
    """Pure-JAX reference matching the PyTorch module semantics."""
    h = jnp.take(emb_table, x_idx, axis=0)
    for layer in range(len(weights) - 1):
        h = jax.nn.relu(h @ weights[layer] + biases[layer])
    return h @ weights[-1] + biases[-1]


if __name__ == "__main__":
    # Module hyper-parameters (small, deterministic).
    nStates = 16
    nStates_emb = 32
    nHidden = [64, 32]
    nActions = 4
    batch = 8

    key = jax.random.PRNGKey(0)
    keys = jax.random.split(key, 10)

    # Deterministic synthetic parameters (shapes per DQNet.__init__).
    emb_table = jax.random.normal(keys[0], (nStates, nStates_emb), jnp.float32) * 0.1

    layer_dims = [nStates_emb] + list(nHidden) + [nActions]
    weights, biases = [], []
    for i, (din, dout) in enumerate(zip(layer_dims[:-1], layer_dims[1:])):
        weights.append(jax.random.normal(keys[1 + i], (din, dout), jnp.float32) * 0.05)
        biases.append(jax.random.normal(keys[5 + i], (dout,), jnp.float32) * 0.01)

    # One-time parameter prep (hoisted casts/reshapes).
    emb_p, ws_p, bs_p = prepare_params(emb_table, weights, biases)
    bs_flat = [b.reshape(-1) for b in bs_p]   # flat biases for the reference

    # --- Path 1: small batch, single grid step (fused gather + MLP). ---
    x_idx = jax.random.randint(keys[4], (batch,), 0, nStates, dtype=jnp.int32)
    out = dqnet_forward(x_idx, emb_p, ws_p, bs_p)
    out = jax.block_until_ready(out)
    ref = _reference_forward(x_idx, emb_table, weights, bs_flat)
    assert out.shape == (batch, nActions)
    assert jnp.allclose(out, ref, atol=1e-5, rtol=1e-5)

    # --- Path 2: large batch, batch-tiled "parallel" grid (exercises megacore path). ---
    big_batch, bt = 512, 128
    x_big = jax.random.randint(keys[9], (big_batch,), 0, nStates, dtype=jnp.int32)
    out_big = dqnet_forward(x_big, emb_p, ws_p, bs_p, batch_tile=bt)
    out_big = jax.block_until_ready(out_big)
    ref_big = _reference_forward(x_big, emb_table, weights, bs_flat)
    assert out_big.shape == (big_batch, nActions)
    assert jnp.allclose(out_big, ref_big, atol=1e-4, rtol=1e-4)

    print("KERNEL_OK")
</pallas_src>

<mosaic_0001>
module attributes {stable_mosaic.version = 11 : i64} {
  func.func @_dqnet_kernel(%arg0: i32, %arg1: memref<8x1xi32, #tpu.memory_space<vmem>>, %arg2: memref<16x32xf32, #tpu.memory_space<vmem>>, %arg3: memref<32x64xf32, #tpu.memory_space<vmem>>, %arg4: memref<1x64xf32, #tpu.memory_space<vmem>>, %arg5: memref<64x32xf32, #tpu.memory_space<vmem>>, %arg6: memref<1x32xf32, #tpu.memory_space<vmem>>, %arg7: memref<32x4xf32, #tpu.memory_space<vmem>>, %arg8: memref<1x4xf32, #tpu.memory_space<vmem>>, %arg9: memref<8x4xf32, #tpu.memory_space<vmem>>) attributes {dimension_semantics = [#tpu.dimension_semantics<arbitrary>], iteration_bounds = array<i64: 1>, scalar_prefetch = 0 : i64, scratch_operands = 0 : i64, tpu.core_type = #tpu.core_type<tc>, window_params = [{transform_indices = @transform_0, window_bounds = array<i64: 8, 1>}, {pipeline_mode = #tpu.pipeline_mode<synchronous>, transform_indices = @transform_1, window_bounds = array<i64: 16, 32>}, {pipeline_mode = #tpu.pipeline_mode<synchronous>, transform_indices = @transform_2, window_bounds = array<i64: 32, 64>}, {pipeline_mode = #tpu.pipeline_mode<synchronous>, transform_indices = @transform_3, window_bounds = array<i64: 1, 64>}, {pipeline_mode = #tpu.pipeline_mode<synchronous>, transform_indices = @transform_4, window_bounds = array<i64: 64, 32>}, {pipeline_mode = #tpu.pipeline_mode<synchronous>, transform_indices = @transform_5, window_bounds = array<i64: 1, 32>}, {pipeline_mode = #tpu.pipeline_mode<synchronous>, transform_indices = @transform_6, window_bounds = array<i64: 32, 4>}, {pipeline_mode = #tpu.pipeline_mode<synchronous>, transform_indices = @transform_7, window_bounds = array<i64: 1, 4>}, {transform_indices = @transform_8, window_bounds = array<i64: 8, 4>}]} {
    %0 = tpu.iota {dimensions = array<i32: 1>} : vector<8x16xi32>
    %c0 = arith.constant 0 : index
    %c0_0 = arith.constant 0 : index
    %1 = vector.load %arg1[%c0, %c0_0] : memref<8x1xi32, #tpu.memory_space<vmem>>, vector<8x1xi32>
    %2 = vector.broadcast %1 : vector<8x1xi32> to vector<8x16xi32>
    %3 = arith.cmpi eq, %0, %2 : vector<8x16xi32>
    %4 = arith.extui %3 : vector<8x16xi1> to vector<8x16xi32>
    %5 = arith.sitofp %4 : vector<8x16xi32> to vector<8x16xf32>
    %c0_1 = arith.constant 0 : index
    %c0_2 = arith.constant 0 : index
    %6 = vector.load %arg2[%c0_1, %c0_2] : memref<16x32xf32, #tpu.memory_space<vmem>>, vector<16x32xf32>
    %cst = arith.constant dense<0.000000e+00> : vector<8x32xf32>
    %7 = tpu.matmul %5, %6, %cst {dimension_numbers = #tpu.dot_dimension_numbers<[1], [0], [0], [1], [0, 0, 1, 1], [], []>} : vector<8x16xf32>, vector<16x32xf32>, vector<8x32xf32> -> vector<8x32xf32>
    %c0_3 = arith.constant 0 : index
    %c0_4 = arith.constant 0 : index
    %8 = vector.load %arg3[%c0_3, %c0_4] : memref<32x64xf32, #tpu.memory_space<vmem>>, vector<32x64xf32>
    %c0_5 = arith.constant 0 : index
    %c0_6 = arith.constant 0 : index
    %9 = vector.load %arg4[%c0_5, %c0_6] : memref<1x64xf32, #tpu.memory_space<vmem>>, vector<1x64xf32>
    %cst_7 = arith.constant dense<0.000000e+00> : vector<8x64xf32>
    %10 = tpu.matmul %7, %8, %cst_7 {dimension_numbers = #tpu.dot_dimension_numbers<[1], [0], [0], [1], [0, 0, 1, 1], [], []>} : vector<8x32xf32>, vector<32x64xf32>, vector<8x64xf32> -> vector<8x64xf32>
    %11 = vector.broadcast %9 : vector<1x64xf32> to vector<8x64xf32>
    %12 = arith.addf %10, %11 : vector<8x64xf32>
    %cst_8 = arith.constant 0.000000e+00 : f32
    %13 = vector.broadcast %cst_8 : f32 to vector<8x64xf32>
    %14 = arith.maximumf %12, %13 : vector<8x64xf32>
    %c0_9 = arith.constant 0 : index
    %c0_10 = arith.constant 0 : index
    %15 = vector.load %arg5[%c0_9, %c0_10] : memref<64x32xf32, #tpu.memory_space<vmem>>, vector<64x32xf32>
    %c0_11 = arith.constant 0 : index
    %c0_12 = arith.constant 0 : index
    %16 = vector.load %arg6[%c0_11, %c0_12] : memref<1x32xf32, #tpu.memory_space<vmem>>, vector<1x32xf32>
    %cst_13 = arith.constant dense<0.000000e+00> : vector<8x32xf32>
    %17 = tpu.matmul %14, %15, %cst_13 {dimension_numbers = #tpu.dot_dimension_numbers<[1], [0], [0], [1], [0, 0, 1, 1], [], []>} : vector<8x64xf32>, vector<64x32xf32>, vector<8x32xf32> -> vector<8x32xf32>
    %18 = vector.broadcast %16 : vector<1x32xf32> to vector<8x32xf32>
    %19 = arith.addf %17, %18 : vector<8x32xf32>
    %cst_14 = arith.constant 0.000000e+00 : f32
    %20 = vector.broadcast %cst_14 : f32 to vector<8x32xf32>
    %21 = arith.maximumf %19, %20 : vector<8x32xf32>
    %c0_15 = arith.constant 0 : index
    %c0_16 = arith.constant 0 : index
    %22 = vector.load %arg7[%c0_15, %c0_16] : memref<32x4xf32, #tpu.memory_space<vmem>>, vector<32x4xf32>
    %c0_17 = arith.constant 0 : index
    %c0_18 = arith.constant 0 : index
    %23 = vector.load %arg8[%c0_17, %c0_18] : memref<1x4xf32, #tpu.memory_space<vmem>>, vector<1x4xf32>
    %cst_19 = arith.constant dense<0.000000e+00> : vector<8x4xf32>
    %24 = tpu.matmul %21, %22, %cst_19 {dimension_numbers = #tpu.dot_dimension_numbers<[1], [0], [0], [1], [0, 0, 1, 1], [], []>} : vector<8x32xf32>, vector<32x4xf32>, vector<8x4xf32> -> vector<8x4xf32>
    %25 = vector.broadcast %23 : vector<1x4xf32> to vector<8x4xf32>
    %26 = arith.addf %24, %25 : vector<8x4xf32>
    %c0_20 = arith.constant 0 : index
    %c0_21 = arith.constant 0 : index
    %27 = vector.load %arg9[%c0_20, %c0_21] : memref<8x4xf32, #tpu.memory_space<vmem>>, vector<8x4xf32>
    tpu.vector_store %arg9[%c0_20, %c0_21], %26 {strides = array<i32>} : memref<8x4xf32, #tpu.memory_space<vmem>>, vector<8x4xf32>,
    return
  }
  func.func @transform_0(%arg0: i32) -> (i32, i32) {
    %c0_i32 = arith.constant 0 : i32
    %c0_i32_0 = arith.constant 0 : i32
    return %arg0, %c0_i32 : i32, i32
  }
  func.func @transform_1(%arg0: i32) -> (i32, i32) {
    %c0_i32 = arith.constant 0 : i32
    %c0_i32_0 = arith.constant 0 : i32
    %c0_i32_1 = arith.constant 0 : i32
    return %c0_i32, %c0_i32_0 : i32, i32
  }
  func.func @transform_2(%arg0: i32) -> (i32, i32) {
    %c0_i32 = arith.constant 0 : i32
    %c0_i32_0 = arith.constant 0 : i32
    %c0_i32_1 = arith.constant 0 : i32
    return %c0_i32, %c0_i32_0 : i32, i32
  }
  func.func @transform_3(%arg0: i32) -> (i32, i32) {
    %c0_i32 = arith.constant 0 : i32
    %c0_i32_0 = arith.constant 0 : i32
    %c0_i32_1 = arith.constant 0 : i32
    return %c0_i32, %c0_i32_0 : i32, i32
  }
  func.func @transform_4(%arg0: i32) -> (i32, i32) {
    %c0_i32 = arith.constant 0 : i32
    %c0_i32_0 = arith.constant 0 : i32
    %c0_i32_1 = arith.constant 0 : i32
    return %c0_i32, %c0_i32_0 : i32, i32
  }
  func.func @transform_5(%arg0: i32) -> (i32, i32) {
    %c0_i32 = arith.constant 0 : i32
    %c0_i32_0 = arith.constant 0 : i32
    %c0_i32_1 = arith.constant 0 : i32
    return %c0_i32, %c0_i32_0 : i32, i32
  }
  func.func @transform_6(%arg0: i32) -> (i32, i32) {
    %c0_i32 = arith.constant 0 : i32
    %c0_i32_0 = arith.constant 0 : i32
    %c0_i32_1 = arith.constant 0 : i32
    return %c0_i32, %c0_i32_0 : i32, i32
  }
  func.func @transform_7(%arg0: i32) -> (i32, i32) {
    %c0_i32 = arith.constant 0 : i32
    %c0_i32_0 = arith.constant 0 : i32
    %c0_i32_1 = arith.constant 0 : i32
    return %c0_i32, %c0_i32_0 : i32, i32
  }
  func.func @transform_8(%arg0: i32) -> (i32, i32) {
    %c0_i32 = arith.constant 0 : i32
    %c0_i32_0 = arith.constant 0 : i32
    return %arg0, %c0_i32 : i32, i32
  }
}

</mosaic_0001>

<llo_original>
// kernel: dqnet_forward.1
$region0: #{dqnet_forward.1}
  #allocation0 [shape = 'u32[]', space=smem, size = 0x4, offset = 0x4, fixed_abs, tag = 'smem constant byte address 0x4 - core index']
  #allocation1 [shape = 'u32[144,128]{1,0:T(1,128)}', space=vmem, size = 0x12000, scoped, tag = 'internal scratch']
  %s0 = inlined_call_operand.vmem [shape: s32[8,1], index: 0, kind: input, shape index: {}]
  %s1 = inlined_call_operand.vmem [shape: f32[16,32], index: 1, kind: input, shape index: {}]
  %s2 = inlined_call_operand.vmem [shape: f32[32,64], index: 2, kind: input, shape index: {}]
  %s3 = inlined_call_operand.vmem [shape: f32[1,64], index: 3, kind: input, shape index: {}]
  %s4 = inlined_call_operand.vmem [shape: f32[64,32], index: 4, kind: input, shape index: {}]
  %s5 = inlined_call_operand.vmem [shape: f32[1,32], index: 5, kind: input, shape index: {}]
  %s6 = inlined_call_operand.vmem [shape: f32[32,4], index: 6, kind: input, shape index: {}]
  %s7 = inlined_call_operand.vmem [shape: f32[1,4], index: 7, kind: input, shape index: {}]
  %s8 = inlined_call_operand.vmem [shape: f32[8,4], index: 8, kind: output, shape index: {}]
  %s9 = sld [smem:[#allocation0]]
  $region42: #{dqnet_forward.1} parent=0
    _
  %s11 = ssub.s32 1, %s9
  %s12 = scalar_select 0, %s11, %s9
  // Predicated region
  $region2: #{dqnet_forward.1} parent=0 // pred_check
    _
  $region3: #{dqnet_forward.1} parent=0 // pred_check_branch
    %14 = sbr.rel (0) target = $region5
  $region4: #{dqnet_forward.1} parent=0 // pred_region
    _
  $region5: #{dqnet_forward.1} parent=0 // pred_fallthru
    _
  // Predicated region
  $region6: #{dqnet_forward.1} parent=0 // pred_check
    _
  $region7: #{dqnet_forward.1} parent=0 // pred_check_branch
    %16 = sbr.rel (0) target = $region9
  $region8: #{dqnet_forward.1} parent=0 // pred_region
    _
  $region9: #{dqnet_forward.1} parent=0 // pred_fallthru
    _
  // Predicated region
  $region10: #{dqnet_forward.1} parent=0 // pred_check
    _
  $region11: #{dqnet_forward.1} parent=0 // pred_check_branch
    %18 = sbr.rel (0) target = $region13
  $region12: #{dqnet_forward.1} parent=0 // pred_region
    _
  $region13: #{dqnet_forward.1} parent=0 // pred_fallthru
    _
  // Predicated region
  $region14: #{dqnet_forward.1} parent=0 // pred_check
    _
  $region15: #{dqnet_forward.1} parent=0 // pred_check_branch
    %20 = sbr.rel (0) target = $region17
  $region16: #{dqnet_forward.1} parent=0 // pred_region
    _
  $region17: #{dqnet_forward.1} parent=0 // pred_fallthru
    _
  // Predicated region
  $region18: #{dqnet_forward.1} parent=0 // pred_check
    _
  $region19: #{dqnet_forward.1} parent=0 // pred_check_branch
    %22 = sbr.rel (0) target = $region21
  $region20: #{dqnet_forward.1} parent=0 // pred_region
    _
  $region21: #{dqnet_forward.1} parent=0 // pred_fallthru
    _
  // Predicated region
  $region22: #{dqnet_forward.1} parent=0 // pred_check
    _
  $region23: #{dqnet_forward.1} parent=0 // pred_check_branch
    %24 = sbr.rel (0) target = $region25
  $region24: #{dqnet_forward.1} parent=0 // pred_region
    _
  $region25: #{dqnet_forward.1} parent=0 // pred_fallthru
    _
  // Predicated region
  $region26: #{dqnet_forward.1} parent=0 // pred_check
    _
  $region27: #{dqnet_forward.1} parent=0 // pred_check_branch
    %26 = sbr.rel (0) target = $region29
  $region28: #{dqnet_forward.1} parent=0 // pred_region
    _
  $region29: #{dqnet_forward.1} parent=0 // pred_fallthru
    _
  // Predicated region
  $region30: #{dqnet_forward.1} parent=0 // pred_check
    _
  $region31: #{dqnet_forward.1} parent=0 // pred_check_branch
    %28 = sbr.rel (0) target = $region33
  $region32: #{dqnet_forward.1} parent=0 // pred_region
    _
  $region33: #{dqnet_forward.1} parent=0 // pred_fallthru
    _
  %v29 = vlaneseq
  %v30 = vand.u32 %v29, 127
  %v31 = vld [vmem:[%s0] sm:$0xff]
  %32 = vset.pattern.permute.xlu0 0
  %33 = vperm.xlu0 %32, %v31
  %v34 = vpop.permute.xlu0 %33
  %vm35 = vcmp.eq.s32.totalorder %v30, %v34
  %v36 = vsel %vm35, 1, 0
  %v37 = vcvt.s32.f32 %v36
  %v38 = vld [vmem:[%s1] sm:$0xff]
  %v39 = vld [vmem:[%s1 + $0x8] sm:$0xff]
  %vm40 = vcmask 130048
  %v42 = vsel %vm40, %v37, 0
  %44 = vmatprep.subr.mxu0 0.0
  %45 = vmatpush1.msra.mxu0 %v38
  %46 = vmatprep.subr.mxu0 0.0
  %47 = vmatpush1.msra.mxu0 %v39
  %48 = vmatprep.subr.mxu0 0.0
  %49 = vmatpush1.msra.mxu0 0.0
  %50 = vmatprep.subr.mxu0 0.0
  %51 = vmatpush1.msra.mxu0 0.0
  %52 = vmatprep.subr.mxu0 0.0
  %53 = vmatpush1.msra.mxu0 0.0
  %54 = vmatprep.subr.mxu0 0.0
  %55 = vmatpush1.msra.mxu0 0.0
  %56 = vmatprep.subr.mxu0 0.0
  %57 = vmatpush1.msra.mxu0 0.0
  %58 = vmatprep.subr.mxu0 0.0
  %59 = vmatpush1.msra.mxu0 0.0
  %60 = vmatprep.subr.mxu0 0.0
  %61 = vmatpush1.msra.mxu0 0.0
  %62 = vmatprep.subr.mxu0 0.0
  %63 = vmatpush1.msra.mxu0 0.0
  %64 = vmatprep.subr.mxu0 0.0
  %65 = vmatpush1.msra.mxu0 0.0
  %66 = vmatprep.subr.mxu0 0.0
  %67 = vmatpush1.msra.mxu0 0.0
  %68 = vmatprep.subr.mxu0 0.0
  %69 = vmatpush1.msra.mxu0 0.0
  %70 = vmatprep.subr.mxu0 0.0
  %71 = vmatpush1.msra.mxu0 0.0
  %72 = vmatprep.subr.mxu0 0.0
  %73 = vmatpush1.msra.mxu0 0.0
  %74 = vmatprep.subr.mxu0 0.0
  %75 = vmatpush1.msra.mxu0 0.0
  %76 = vmatprep.subr.mxu0 0.0
  %77 = vmatpush1.msra.mxu0 0.0
  %78 = vmatprep.subr.mxu0 0.0
  %79 = vmatpush1.msra.mxu0 0.0
  %80 = vmatprep.subr.mxu0 0.0
  %81 = vmatpush1.msra.mxu0 0.0
  %82 = vmatprep.subr.mxu0 0.0
  %83 = vmatpush1.msra.mxu0 0.0
  %84 = vmatprep.subr.mxu0 0.0
  %85 = vmatpush1.msra.mxu0 0.0
  %86 = vmatprep.subr.mxu0 0.0
  %87 = vmatpush1.msra.mxu0 0.0
  %88 = vmatprep.subr.mxu0 0.0
  %89 = vmatpush1.msra.mxu0 0.0
  %90 = vmatprep.subr.mxu0 0.0
  %91 = vmatpush1.msra.mxu0 0.0
  %92 = vmatprep.subr.mxu0 0.0
  %93 = vmatpush1.msra.mxu0 0.0
  %94 = vmatprep.subr.mxu0 0.0
  %95 = vmatpush1.msra.mxu0 0.0
  %96 = vmatprep.subr.mxu0 0.0
  %97 = vmatpush1.msra.mxu0 0.0
  %98 = vmatprep.subr.mxu0 0.0
  %99 = vmatpush1.msra.mxu0 0.0
  %100 = vmatprep.subr.mxu0 0.0
  %101 = vmatpush1.msra.mxu0 0.0
  %102 = vmatprep.subr.mxu0 0.0
  %103 = vmatpush1.msra.mxu0 0.0
  %104 = vmatprep.subr.mxu0 0.0
  %105 = vmatpush1.msra.mxu0 0.0
  %106 = vmatprep.subr.mxu0 0.0
  %107 = vmatpush1.msra.mxu0 0.0
  %108 = vmatprep.mubr.f32.mxu0 0.0
  %109 = vmatmul.mubr.f32.gmra.mrb[0].mxu0 %v42
  %v110 = vpop.f32.mrb[0].mxu0
  %v111 = vadd.f32 0.0, %v110
  %v112 = vpop.f32.mrb[0].mxu0
  %113 = vdwg.mxu0
  %v114 = vld [vmem:[%s2] sm:$0xff]
  %v115 = vld [vmem:[%s2 + $0x8] sm:$0xff]
  %v116 = vld [vmem:[%s2 + $0x10] sm:$0xff]
  %v117 = vld [vmem:[%s2 + $0x18] sm:$0xff]
  %v118 = vld [vmem:[%s3] sm:$0x1]
  %v120 = vlaneseq
  %v121 = vshrl.u32 %v120, 7
  %v122 = vsub.s32 0, %v121
  %v123 = vrot.slane %v118, %v122
  %vm125 = vcmask 261120
  %v127 = vsel %vm125, %v111, 0
  %129 = vmatprep.subr.mxu0 0.0
  %130 = vmatpush1.msra.mxu0 %v114
  %131 = vmatprep.subr.mxu0 0.0
  %132 = vmatpush1.msra.mxu0 %v115
  %133 = vmatprep.subr.mxu0 0.0
  %134 = vmatpush1.msra.mxu0 %v116
  %135 = vmatprep.subr.mxu0 0.0
  %136 = vmatpush1.msra.mxu0 %v117
  %137 = vmatprep.subr.mxu0 0.0
  %138 = vmatpush1.msra.mxu0 0.0
  %139 = vmatprep.subr.mxu0 0.0
  %140 = vmatpush1.msra.mxu0 0.0
  %141 = vmatprep.subr.mxu0 0.0
  %142 = vmatpush1.msra.mxu0 0.0
  %143 = vmatprep.subr.mxu0 0.0
  %144 = vmatpush1.msra.mxu0 0.0
  %145 = vmatprep.subr.mxu0 0.0
  %146 = vmatpush1.msra.mxu0 0.0
  %147 = vmatprep.subr.mxu0 0.0
  %148 = vmatpush1.msra.mxu0 0.0
  %149 = vmatprep.subr.mxu0 0.0
  %150 = vmatpush1.msra.mxu0 0.0
  %151 = vmatprep.subr.mxu0 0.0
  %152 = vmatpush1.msra.mxu0 0.0
  %153 = vmatprep.subr.mxu0 0.0
  %154 = vmatpush1.msra.mxu0 0.0
  %155 = vmatprep.subr.mxu0 0.0
  %156 = vmatpush1.msra.mxu0 0.0
  %157 = vmatprep.subr.mxu0 0.0
  %158 = vmatpush1.msra.mxu0 0.0
  %159 = vmatprep.subr.mxu0 0.0
  %160 = vmatpush1.msra.mxu0 0.0
  %161 = vmatprep.subr.mxu0 0.0
  %162 = vmatpush1.msra.mxu0 0.0
  %163 = vmatprep.subr.mxu0 0.0
  %164 = vmatpush1.msra.mxu0 0.0
  %165 = vmatprep.subr.mxu0 0.0
  %166 = vmatpush1.msra.mxu0 0.0
  %167 = vmatprep.subr.mxu0 0.0
  %168 = vmatpush1.msra.mxu0 0.0
  %169 = vmatprep.subr.mxu0 0.0
  %170 = vmatpush1.msra.mxu0 0.0
  %171 = vmatprep.subr.mxu0 0.0
  %172 = vmatpush1.msra.mxu0 0.0
  %173 = vmatprep.subr.mxu0 0.0
  %174 = vmatpush1.msra.mxu0 0.0
  %175 = vmatprep.subr.mxu0 0.0
  %176 = vmatpush1.msra.mxu0 0.0
  %177 = vmatprep.subr.mxu0 0.0
  %178 = vmatpush1.msra.mxu0 0.0
  %179 = vmatprep.subr.mxu0 0.0
  %180 = vmatpush1.msra.mxu0 0.0
  %181 = vmatprep.subr.mxu0 0.0
  %182 = vmatpush1.msra.mxu0 0.0
  %183 = vmatprep.subr.mxu0 0.0
  %184 = vmatpush1.msra.mxu0 0.0
  %185 = vmatprep.subr.mxu0 0.0
  %186 = vmatpush1.msra.mxu0 0.0
  %187 = vmatprep.subr.mxu0 0.0
  %188 = vmatpush1.msra.mxu0 0.0
  %189 = vmatprep.subr.mxu0 0.0
  %190 = vmatpush1.msra.mxu0 0.0
  %191 = vmatprep.subr.mxu0 0.0
  %192 = vmatpush1.msra.mxu0 0.0
  %193 = vmatprep.mubr.f32.mxu0 0.0
  %194 = vmatmul.mubr.f32.gmra.mrb[0].mxu0 %v127
  %v195 = vpop.f32.mrb[0].mxu0
  %v196 = vadd.f32 %v123, %v195
  %v197 = vpop.f32.mrb[0].mxu0
  %198 = vdwg.mxu0
  %v199 = vmax.f32 %v196, 0.0
  %v200 = vld [vmem:[%s4] sm:$0xff]
  %v201 = vld [vmem:[%s4 + $0x8] sm:$0xff]
  %v202 = vld [vmem:[%s4 + $0x10] sm:$0xff]
  %v203 = vld [vmem:[%s4 + $0x18] sm:$0xff]
  %v204 = vld [vmem:[%s4 + $0x20] sm:$0xff]
  %v205 = vld [vmem:[%s4 + $0x28] sm:$0xff]
  %v206 = vld [vmem:[%s4 + $0x30] sm:$0xff]
  %v207 = vld [vmem:[%s4 + $0x38] sm:$0xff]
  %v208 = vld [vmem:[%s5] sm:$0x1]
  %v210 = vlaneseq
  %v211 = vshrl.u32 %v210, 7
  %v212 = vsub.s32 0, %v211
  %v213 = vrot.slane %v208, %v212
  %vm215 = vcmask 523264
  %v217 = vsel %vm215, %v199, 0
  %219 = vmatprep.subr.mxu0 0.0
  %220 = vmatpush1.msra.mxu0 %v200
  %221 = vmatprep.subr.mxu0 0.0
  %222 = vmatpush1.msra.mxu0 %v201
  %223 = vmatprep.subr.mxu0 0.0
  %224 = vmatpush1.msra.mxu0 %v202
  %225 = vmatprep.subr.mxu0 0.0
  %226 = vmatpush1.msra.mxu0 %v203
  %227 = vmatprep.subr.mxu0 0.0
  %228 = vmatpush1.msra.mxu0 %v204
  %229 = vmatprep.subr.mxu0 0.0
  %230 = vmatpush1.msra.mxu0 %v205
  %231 = vmatprep.subr.mxu0 0.0
  %232 = vmatpush1.msra.mxu0 %v206
  %233 = vmatprep.subr.mxu0 0.0
  %234 = vmatpush1.msra.mxu0 %v207
  %235 = vmatprep.subr.mxu0 0.0
  %236 = vmatpush1.msra.mxu0 0.0
  %237 = vmatprep.subr.mxu0 0.0
  %238 = vmatpush1.msra.mxu0 0.0
  %239 = vmatprep.subr.mxu0 0.0
  %240 = vmatpush1.msra.mxu0 0.0
  %241 = vmatprep.subr.mxu0 0.0
  %242 = vmatpush1.msra.mxu0 0.0
  %243 = vmatprep.subr.mxu0 0.0
  %244 = vmatpush1.msra.mxu0 0.0
  %245 = vmatprep.subr.mxu0 0.0
  %246 = vmatpush1.msra.mxu0 0.0
  %247 = vmatprep.subr.mxu0 0.0
  %248 = vmatpush1.msra.mxu0 0.0
  %249 = vmatprep.subr.mxu0 0.0
  %250 = vmatpush1.msra.mxu0 0.0
  %251 = vmatprep.subr.mxu0 0.0
  %252 = vmatpush1.msra.mxu0 0.0
  %253 = vmatprep.subr.mxu0 0.0
  %254 = vmatpush1.msra.mxu0 0.0
  %255 = vmatprep.subr.mxu0 0.0
  %256 = vmatpush1.msra.mxu0 0.0
  %257 = vmatprep.subr.mxu0 0.0
  %258 = vmatpush1.msra.mxu0 0.0
  %259 = vmatprep.subr.mxu0 0.0
  %260 = vmatpush1.msra.mxu0 0.0
  %261 = vmatprep.subr.mxu0 0.0
  %262 = vmatpush1.msra.mxu0 0.0
  %263 = vmatprep.subr.mxu0 0.0
  %264 = vmatpush1.msra.mxu0 0.0
  %265 = vmatprep.subr.mxu0 0.0
  %266 = vmatpush1.msra.mxu0 0.0
  %267 = vmatprep.subr.mxu0 0.0
  %268 = vmatpush1.msra.mxu0 0.0
  %269 = vmatprep.subr.mxu0 0.0
  %270 = vmatpush1.msra.mxu0 0.0
  %271 = vmatprep.subr.mxu0 0.0
  %272 = vmatpush1.msra.mxu0 0.0
  %273 = vmatprep.subr.mxu0 0.0
  %274 = vmatpush1.msra.mxu0 0.0
  %275 = vmatprep.subr.mxu0 0.0
  %276 = vmatpush1.msra.mxu0 0.0
  %277 = vmatprep.subr.mxu0 0.0
  %278 = vmatpush1.msra.mxu0 0.0
  %279 = vmatprep.subr.mxu0 0.0
  %280 = vmatpush1.msra.mxu0 0.0
  %281 = vmatprep.subr.mxu0 0.0
  %282 = vmatpush1.msra.mxu0 0.0
  %283 = vmatprep.mubr.f32.mxu0 0.0
  %284 = vmatmul.mubr.f32.gmra.mrb[0].mxu0 %v217
  %v285 = vpop.f32.mrb[0].mxu0
  %v286 = vadd.f32 %v213, %v285
  %v287 = vpop.f32.mrb[0].mxu0
  %288 = vdwg.mxu0
  %v289 = vmax.f32 %v286, 0.0
  %v290 = vld [vmem:[%s6] sm:$0xff]
  %v291 = vld [vmem:[%s6 + $0x8] sm:$0xff]
  %v292 = vld [vmem:[%s6 + $0x10] sm:$0xff]
  %v293 = vld [vmem:[%s6 + $0x18] sm:$0xff]
  %v294 = vld [vmem:[%s7] sm:$0x1]
  %v296 = vlaneseq
  %v297 = vshrl.u32 %v296, 7
  %v298 = vsub.s32 0, %v297
  %v299 = vrot.slane %v294, %v298
  %v302 = vsel %vm125, %v289, 0
  %304 = vmatprep.subr.mxu0 0.0
  %305 = vmatpush1.msra.mxu0 %v290
  %306 = vmatprep.subr.mxu0 0.0
  %307 = vmatpush1.msra.mxu0 %v291
  %308 = vmatprep.subr.mxu0 0.0
  %309 = vmatpush1.msra.mxu0 %v292
  %310 = vmatprep.subr.mxu0 0.0
  %311 = vmatpush1.msra.mxu0 %v293
  %312 = vmatprep.subr.mxu0 0.0
  %313 = vmatpush1.msra.mxu0 0.0
  %314 = vmatprep.subr.mxu0 0.0
  %315 = vmatpush1.msra.mxu0 0.0
  %316 = vmatprep.subr.mxu0 0.0
  %317 = vmatpush1.msra.mxu0 0.0
  %318 = vmatprep.subr.mxu0 0.0
  %319 = vmatpush1.msra.mxu0 0.0
  %320 = vmatprep.subr.mxu0 0.0
  %321 = vmatpush1.msra.mxu0 0.0
  %322 = vmatprep.subr.mxu0 0.0
  %323 = vmatpush1.msra.mxu0 0.0
  %324 = vmatprep.subr.mxu0 0.0
  %325 = vmatpush1.msra.mxu0 0.0
  %326 = vmatprep.subr.mxu0 0.0
  %327 = vmatpush1.msra.mxu0 0.0
  %328 = vmatprep.subr.mxu0 0.0
  %329 = vmatpush1.msra.mxu0 0.0
  %330 = vmatprep.subr.mxu0 0.0
  %331 = vmatpush1.msra.mxu0 0.0
  %332 = vmatprep.subr.mxu0 0.0
  %333 = vmatpush1.msra.mxu0 0.0
  %334 = vmatprep.subr.mxu0 0.0
  %335 = vmatpush1.msra.mxu0 0.0
  %336 = vmatprep.subr.mxu0 0.0
  %337 = vmatpush1.msra.mxu0 0.0
  %338 = vmatprep.subr.mxu0 0.0
  %339 = vmatpush1.msra.mxu0 0.0
  %340 = vmatprep.subr.mxu0 0.0
  %341 = vmatpush1.msra.mxu0 0.0
  %342 = vmatprep.subr.mxu0 0.0
  %343 = vmatpush1.msra.mxu0 0.0
  %344 = vmatprep.subr.mxu0 0.0
  %345 = vmatpush1.msra.mxu0 0.0
  %346 = vmatprep.subr.mxu0 0.0
  %347 = vmatpush1.msra.mxu0 0.0
  %348 = vmatprep.subr.mxu0 0.0
  %349 = vmatpush1.msra.mxu0 0.0
  %350 = vmatprep.subr.mxu0 0.0
  %351 = vmatpush1.msra.mxu0 0.0
  %352 = vmatprep.subr.mxu0 0.0
  %353 = vmatpush1.msra.mxu0 0.0
  %354 = vmatprep.subr.mxu0 0.0
  %355 = vmatpush1.msra.mxu0 0.0
  %356 = vmatprep.subr.mxu0 0.0
  %357 = vmatpush1.msra.mxu0 0.0
  %358 = vmatprep.subr.mxu0 0.0
  %359 = vmatpush1.msra.mxu0 0.0
  %360 = vmatprep.subr.mxu0 0.0
  %361 = vmatpush1.msra.mxu0 0.0
  %362 = vmatprep.subr.mxu0 0.0
  %363 = vmatpush1.msra.mxu0 0.0
  %364 = vmatprep.subr.mxu0 0.0
  %365 = vmatpush1.msra.mxu0 0.0
  %366 = vmatprep.subr.mxu0 0.0
  %367 = vmatpush1.msra.mxu0 0.0
  %368 = vmatprep.mubr.f32.mxu0 0.0
  %369 = vmatmul.mubr.f32.gmra.mrb[0].mxu0 %v302
  %v370 = vpop.f32.mrb[0].mxu0
  %v371 = vadd.f32 %v299, %v370
  %v372 = vpop.f32.mrb[0].mxu0
  %373 = vdwg.mxu0
  %vm374 = vcmask 31744
  %375 = vst.msk [vmem:[%s8] sm:$0xff] %vm374, %v371
  // Predicated region
  $region34: #{dqnet_forward.1} parent=0 // pred_check
    _
  $region35: #{dqnet_forward.1} parent=0 // pred_check_branch
    %377 = sbr.rel (0) target = $region37
  $region36: #{dqnet_forward.1} parent=0 // pred_region
    _
  $region37: #{dqnet_forward.1} parent=0 // pred_fallthru
    _
  // Predicated region
  $region38: #{dqnet_forward.1} parent=0 // pred_check
    _
  $region39: #{dqnet_forward.1} parent=0 // pred_check_branch
    %379 = sbr.rel (0) target = $region41
  $region40: #{dqnet_forward.1} parent=0 // pred_region
    _
  $region41: #{dqnet_forward.1} parent=0 // pred_fallthru
    _

</llo_original>
